<compile_context>
chip_gen: v5e
topology: v5e:2x2
jax: 0.10.0
libtpu: 0.0.40
codegen_flags: <defaults>
</compile_context>

<pallas_src>
import functools

import jax
import jax.numpy as jnp
from jax.experimental import pallas as pl
from jax.experimental.pallas import tpu as pltpu

LANE = 128  # lane width


def _mde_kernel(*refs, rows, br, bpshard, needs_bounds, has_mask):
    if has_mask:
        pred_ref, tgt_ref, msk_ref, sq_ref, d_ref, cnt_ref = refs
    else:
        pred_ref, tgt_ref, sq_ref, d_ref, cnt_ref = refs
        msk_ref = None

    i = pl.program_id(0)  # shard ("parallel" axis, one per TensorCore on v7x)
    j = pl.program_id(1)  # block within shard ("arbitrary" reduction axis)

    @pl.when(j == 0)
    def _init():
        sq_ref[...] = jnp.zeros_like(sq_ref)
        d_ref[...] = jnp.zeros_like(d_ref)
        cnt_ref[...] = jnp.zeros_like(cnt_ref)

    pred = pred_ref[...].astype(jnp.float32)
    tgt = tgt_ref[...].astype(jnp.float32)

    # valid = (target > 0) [& mask] [& in-bounds rows of ragged/overhang block]
    valid = tgt > 0.0
    if msk_ref is not None:
        valid = jnp.logical_and(valid, msk_ref[...] != 0.0)
    if needs_bounds:
        row = jax.lax.broadcasted_iota(jnp.int32, (br, LANE), 0)
        base = (i * bpshard + j) * br  # *logical* (unclamped) block origin
        valid = jnp.logical_and(valid, row + base < rows)

    # pred_fix = where(pred == 0, 1e-24, pred); invalid lanes give
    # log(1) - log(1) == 0 exactly, so no select is needed on the result.
    safe_p = jnp.where(valid, jnp.where(pred == 0.0, 1e-24, pred), 1.0)
    safe_t = jnp.where(valid, tgt, 1.0)
    diff = jnp.log(safe_t) - jnp.log(safe_p)

    # Fold the (br, 128) block down into the resident (1, 8, 128) accumulators.
    sq_ref[...] += jnp.sum((diff * diff).reshape(br // 8, 8, LANE),
                           axis=0, keepdims=True)
    d_ref[...] += jnp.sum(diff.reshape(br // 8, 8, LANE),
                          axis=0, keepdims=True)
    cnt_ref[...] += jnp.sum(valid.astype(jnp.float32).reshape(br // 8, 8, LANE),
                            axis=0, keepdims=True)


def _round_up(x, m):
    return (x + m - 1) // m * m


def _sublane_granularity(dtype):
    # Min sublane tile: 8 for 4-byte dtypes, 16 for 2-byte, 32 for 1-byte.
    return max(8, 32 // jnp.dtype(dtype).itemsize)


def mde_loss(pred, target, mask=None, lambd=0.85, *,
             block_rows=2048, num_shards=2):
    """Pallas TPU implementation of MDELoss.forward.  Returns a scalar f32."""
    pred_f = pred.reshape(-1)
    tgt_f = target.reshape(-1)
    n = pred_f.shape[0]

    rows = pl.cdiv(n, LANE)
    tail = rows * LANE - n
    if tail:
        # Only the sub-128-element ragged tail is padded (target == 0 there is
        # excluded by the validity mask); the common multiple-of-128 case does
        # zero padding passes over HBM.
        pred_f = jnp.pad(pred_f, (0, tail))
        tgt_f = jnp.pad(tgt_f, (0, tail))

    inputs = [pred_f.reshape(rows, LANE), tgt_f.reshape(rows, LANE)]
    if mask is not None:
        # Mask streamed as f32 for layout robustness; an int8 mask would cut
        # its HBM traffic 4x if this path ever becomes hot.
        msk_f = mask.reshape(-1).astype(jnp.float32)
        if tail:
            msk_f = jnp.pad(msk_f, (0, tail))
        inputs.append(msk_f.reshape(rows, LANE))

    gran = max(_sublane_granularity(x.dtype) for x in inputs)
    br = min(_round_up(block_rows, gran), _round_up(rows, gran))
    n_blocks = pl.cdiv(rows, br)
    shards = max(1, min(num_shards, n_blocks))
    bpshard = pl.cdiv(n_blocks, shards)
    # True when the grid logically covers more rows than exist (ragged last
    # block and/or whole overhang blocks in the last shard).
    needs_bounds = shards * bpshard * br > rows

    def _in_map(i, j):
        # Clamp so an overhang block (last shard) never DMAs past the array;
        # the in-kernel bounds mask (built from the unclamped index) zeroes its
        # contribution anyway.
        return (jnp.minimum(i * bpshard + j, n_blocks - 1), 0)

    in_specs = [pl.BlockSpec((br, LANE), _in_map) for _ in inputs]
    acc_spec = pl.BlockSpec((1, 8, LANE), lambda i, j: (i, 0, 0))
    acc_shape = jax.ShapeDtypeStruct((shards, 8, LANE), jnp.float32)

    kernel = functools.partial(
        _mde_kernel, rows=rows, br=br, bpshard=bpshard,
        needs_bounds=needs_bounds, has_mask=mask is not None)

    sq, d, cnt = pl.pallas_call(
        kernel,
        out_shape=(acc_shape, acc_shape, acc_shape),
        grid=(shards, bpshard),
        in_specs=in_specs,
        out_specs=(acc_spec, acc_spec, acc_spec),
        compiler_params=pltpu.CompilerParams(
            dimension_semantics=("parallel", "arbitrary")),
    )(*inputs)

    # Tiny epilogue in plain JAX: combine per-shard / per-lane partials.
    nv = jnp.sum(cnt)
    mean_sq = jnp.sum(sq) / nv
    mean = jnp.sum(d) / nv
    # Clamp epsilon-negative f32 rounding before sqrt; NaN (nv == 0) still
    # propagates, matching the PyTorch reference.
    return jnp.sqrt(jnp.maximum(mean_sq - lambd * mean * mean, 0.0))


def _mde_loss_ref(pred, target, mask=None, lambd=0.85):
    # Pure-JAX reference mirroring the PyTorch forward.
    pred = pred.astype(jnp.float32)
    target = target.astype(jnp.float32)
    pred_fix = jnp.where(pred == 0.0, 1e-24, pred)
    valid = target > 0.0
    if mask is not None:
        valid = jnp.logical_and(valid, mask.astype(jnp.float32) != 0.0)
    safe_t = jnp.where(valid, target, 1.0)
    safe_p = jnp.where(valid, pred_fix, 1.0)
    diff = jnp.where(valid, jnp.log(safe_t) - jnp.log(safe_p), 0.0)
    cnt = jnp.sum(valid.astype(jnp.float32))
    mean_sq = jnp.sum(diff * diff) / cnt
    mean = jnp.sum(diff) / cnt
    return jnp.sqrt(jnp.maximum(mean_sq - lambd * mean * mean, 0.0))


if __name__ == "__main__":
    key = jax.random.PRNGKey(0)
    k1, k2, k3, k4 = jax.random.split(key, 4)

    B, C, H, W = 2, 4, 16, 16
    # Positive, depth-like predictions/targets; some targets zeroed so the
    # validity mask is exercised.
    pred = jax.random.uniform(k1, (B, C, H, W), jnp.float32, 0.1, 10.0)
    target = jax.random.uniform(k2, (B, C, H, W), jnp.float32, 0.1, 10.0)
    drop = jax.random.uniform(k3, (B, C, H, W), jnp.float32) < 0.2
    target = jnp.where(drop, 0.0, target)
    mask = (jax.random.uniform(k4, (B, C, H, W), jnp.float32) < 0.7
            ).astype(jnp.float32)

    # Common path: mask=None -> 2-stream kernel.
    loss = jax.block_until_ready(mde_loss(pred, target))
    ref = jax.block_until_ready(_mde_loss_ref(pred, target))
    if not jnp.isfinite(loss):
        raise RuntimeError("non-finite loss (no-mask path)")
    if abs(float(loss) - float(ref)) > 1e-5 + 1e-5 * abs(float(ref)):
        raise RuntimeError(
            f"mismatch (no-mask): kernel={float(loss)} ref={float(ref)}")

    # Explicit-mask path: 3-stream kernel.
    loss_m = jax.block_until_ready(mde_loss(pred, target, mask=mask))
    ref_m = jax.block_until_ready(_mde_loss_ref(pred, target, mask=mask))
    if not jnp.isfinite(loss_m):
        raise RuntimeError("non-finite loss (mask path)")
    if abs(float(loss_m) - float(ref_m)) > 1e-5 + 1e-5 * abs(float(ref_m)):
        raise RuntimeError(
            f"mismatch (mask): kernel={float(loss_m)} ref={float(ref_m)}")

    print("KERNEL_OK")
</pallas_src>

<mosaic_0001>
module attributes {stable_mosaic.version = 11 : i64} {
  func.func @_mde_kernel(%arg0: i32, %arg1: i32, %arg2: memref<16x128xf32, #tpu.memory_space<vmem>>, %arg3: memref<16x128xf32, #tpu.memory_space<vmem>>, %arg4: memref<1x8x128xf32, #tpu.memory_space<vmem>>, %arg5: memref<1x8x128xf32, #tpu.memory_space<vmem>>, %arg6: memref<1x8x128xf32, #tpu.memory_space<vmem>>) attributes {dimension_semantics = [#tpu.dimension_semantics<parallel>, #tpu.dimension_semantics<arbitrary>], iteration_bounds = array<i64: 1, 1>, scalar_prefetch = 0 : i64, scratch_operands = 0 : i64, tpu.core_type = #tpu.core_type<tc>, window_params = [{transform_indices = @transform_0, window_bounds = array<i64: 16, 128>}, {transform_indices = @transform_1, window_bounds = array<i64: 16, 128>}, {transform_indices = @transform_2, window_bounds = array<i64: 1, 8, 128>}, {transform_indices = @transform_3, window_bounds = array<i64: 1, 8, 128>}, {transform_indices = @transform_4, window_bounds = array<i64: 1, 8, 128>}]} {
    %c0_i32 = arith.constant 0 : i32
    %0 = arith.cmpi eq, %arg1, %c0_i32 : i32
    %1 = arith.extui %0 : i1 to i32
    %c0_i32_0 = arith.constant 0 : i32
    %2 = arith.cmpi ne, %1, %c0_i32_0 : i32
    scf.if %2 {
      %cst_29 = arith.constant 0.000000e+00 : f32
      %39 = vector.broadcast %cst_29 : f32 to vector<1x8x128xf32>
      %c0_30 = arith.constant 0 : index
      %c0_31 = arith.constant 0 : index
      %c0_32 = arith.constant 0 : index
      %40 = vector.load %arg4[%c0_30, %c0_31, %c0_32] : memref<1x8x128xf32, #tpu.memory_space<vmem>>, vector<1x8x128xf32>
      tpu.vector_store %arg4[%c0_30, %c0_31, %c0_32], %39 {strides = array<i32>} : memref<1x8x128xf32, #tpu.memory_space<vmem>>, vector<1x8x128xf32>,
      %cst_33 = arith.constant 0.000000e+00 : f32
      %41 = vector.broadcast %cst_33 : f32 to vector<1x8x128xf32>
      %c0_34 = arith.constant 0 : index
      %c0_35 = arith.constant 0 : index
      %c0_36 = arith.constant 0 : index
      %42 = vector.load %arg5[%c0_34, %c0_35, %c0_36] : memref<1x8x128xf32, #tpu.memory_space<vmem>>, vector<1x8x128xf32>
      tpu.vector_store %arg5[%c0_34, %c0_35, %c0_36], %41 {strides = array<i32>} : memref<1x8x128xf32, #tpu.memory_space<vmem>>, vector<1x8x128xf32>,
      %cst_37 = arith.constant 0.000000e+00 : f32
      %43 = vector.broadcast %cst_37 : f32 to vector<1x8x128xf32>
      %c0_38 = arith.constant 0 : index
      %c0_39 = arith.constant 0 : index
      %c0_40 = arith.constant 0 : index
      %44 = vector.load %arg6[%c0_38, %c0_39, %c0_40] : memref<1x8x128xf32, #tpu.memory_space<vmem>>, vector<1x8x128xf32>
      tpu.vector_store %arg6[%c0_38, %c0_39, %c0_40], %43 {strides = array<i32>} : memref<1x8x128xf32, #tpu.memory_space<vmem>>, vector<1x8x128xf32>,
    } else {
    }
    %c0 = arith.constant 0 : index
    %c0_1 = arith.constant 0 : index
    %3 = vector.load %arg2[%c0, %c0_1] : memref<16x128xf32, #tpu.memory_space<vmem>>, vector<16x128xf32>
    %c0_2 = arith.constant 0 : index
    %c0_3 = arith.constant 0 : index
    %4 = vector.load %arg3[%c0_2, %c0_3] : memref<16x128xf32, #tpu.memory_space<vmem>>, vector<16x128xf32>
    %cst = arith.constant 0.000000e+00 : f32
    %5 = vector.broadcast %cst : f32 to vector<16x128xf32>
    %6 = arith.cmpf ogt, %4, %5 : vector<16x128xf32>
    %cst_4 = arith.constant 0.000000e+00 : f32
    %7 = vector.broadcast %cst_4 : f32 to vector<16x128xf32>
    %8 = arith.cmpf oeq, %3, %7 : vector<16x128xf32>
    %cst_5 = arith.constant 1.000000e-24 : f32
    %9 = vector.broadcast %cst_5 : f32 to vector<16x128xf32>
    %10 = arith.select %8, %9, %3 : vector<16x128xi1>, vector<16x128xf32>
    %cst_6 = arith.constant 1.000000e+00 : f32
    %11 = vector.broadcast %cst_6 : f32 to vector<16x128xf32>
    %12 = arith.select %6, %10, %11 : vector<16x128xi1>, vector<16x128xf32>
    %cst_7 = arith.constant 1.000000e+00 : f32
    %13 = vector.broadcast %cst_7 : f32 to vector<16x128xf32>
    %14 = arith.select %6, %4, %13 : vector<16x128xi1>, vector<16x128xf32>
    %15 = math.log %14 : vector<16x128xf32>
    %16 = math.log %12 : vector<16x128xf32>
    %17 = arith.subf %15, %16 : vector<16x128xf32>
    %c0_8 = arith.constant 0 : index
    %c0_9 = arith.constant 0 : index
    %c0_10 = arith.constant 0 : index
    %18 = vector.load %arg4[%c0_8, %c0_9, %c0_10] : memref<1x8x128xf32, #tpu.memory_space<vmem>>, vector<1x8x128xf32>
    %19 = arith.mulf %17, %17 : vector<16x128xf32>
    %20 = vector.shape_cast %19 : vector<16x128xf32> to vector<2x8x128xf32>
    %cst_11 = arith.constant dense<0.000000e+00> : vector<8x128xf32>
    %21 = vector.multi_reduction <add>, %20, %cst_11 [0] : vector<2x8x128xf32> to vector<8x128xf32>
    %22 = vector.shape_cast %21 : vector<8x128xf32> to vector<1x8x128xf32>
    %23 = arith.addf %18, %22 : vector<1x8x128xf32>
    %c0_12 = arith.constant 0 : index
    %c0_13 = arith.constant 0 : index
    %c0_14 = arith.constant 0 : index
    %24 = vector.load %arg4[%c0_12, %c0_13, %c0_14] : memref<1x8x128xf32, #tpu.memory_space<vmem>>, vector<1x8x128xf32>
    tpu.vector_store %arg4[%c0_12, %c0_13, %c0_14], %23 {strides = array<i32>} : memref<1x8x128xf32, #tpu.memory_space<vmem>>, vector<1x8x128xf32>,
    %c0_15 = arith.constant 0 : index
    %c0_16 = arith.constant 0 : index
    %c0_17 = arith.constant 0 : index
    %25 = vector.load %arg5[%c0_15, %c0_16, %c0_17] : memref<1x8x128xf32, #tpu.memory_space<vmem>>, vector<1x8x128xf32>
    %26 = vector.shape_cast %17 : vector<16x128xf32> to vector<2x8x128xf32>
    %cst_18 = arith.constant dense<0.000000e+00> : vector<8x128xf32>
    %27 = vector.multi_reduction <add>, %26, %cst_18 [0] : vector<2x8x128xf32> to vector<8x128xf32>
    %28 = vector.shape_cast %27 : vector<8x128xf32> to vector<1x8x128xf32>
    %29 = arith.addf %25, %28 : vector<1x8x128xf32>
    %c0_19 = arith.constant 0 : index
    %c0_20 = arith.constant 0 : index
    %c0_21 = arith.constant 0 : index
    %30 = vector.load %arg5[%c0_19, %c0_20, %c0_21] : memref<1x8x128xf32, #tpu.memory_space<vmem>>, vector<1x8x128xf32>
    tpu.vector_store %arg5[%c0_19, %c0_20, %c0_21], %29 {strides = array<i32>} : memref<1x8x128xf32, #tpu.memory_space<vmem>>, vector<1x8x128xf32>,
    %c0_22 = arith.constant 0 : index
    %c0_23 = arith.constant 0 : index
    %c0_24 = arith.constant 0 : index
    %31 = vector.load %arg6[%c0_22, %c0_23, %c0_24] : memref<1x8x128xf32, #tpu.memory_space<vmem>>, vector<1x8x128xf32>
    %32 = arith.extui %6 : vector<16x128xi1> to vector<16x128xi32>
    %33 = arith.sitofp %32 : vector<16x128xi32> to vector<16x128xf32>
    %34 = vector.shape_cast %33 : vector<16x128xf32> to vector<2x8x128xf32>
    %cst_25 = arith.constant dense<0.000000e+00> : vector<8x128xf32>
    %35 = vector.multi_reduction <add>, %34, %cst_25 [0] : vector<2x8x128xf32> to vector<8x128xf32>
    %36 = vector.shape_cast %35 : vector<8x128xf32> to vector<1x8x128xf32>
    %37 = arith.addf %31, %36 : vector<1x8x128xf32>
    %c0_26 = arith.constant 0 : index
    %c0_27 = arith.constant 0 : index
    %c0_28 = arith.constant 0 : index
    %38 = vector.load %arg6[%c0_26, %c0_27, %c0_28] : memref<1x8x128xf32, #tpu.memory_space<vmem>>, vector<1x8x128xf32>
    tpu.vector_store %arg6[%c0_26, %c0_27, %c0_28], %37 {strides = array<i32>} : memref<1x8x128xf32, #tpu.memory_space<vmem>>, vector<1x8x128xf32>,
    return
  }
  func.func @transform_0(%arg0: i32, %arg1: i32) -> (i32, i32) {
    %c1_i32 = arith.constant 1 : i32
    %0 = arith.muli %arg0, %c1_i32 : i32
    %1 = arith.addi %0, %arg1 : i32
    %c0_i32 = arith.constant 0 : i32
    %2 = arith.minsi %1, %c0_i32 : i32
    %c0_i32_0 = arith.constant 0 : i32
    %c0_i32_1 = arith.constant 0 : i32
    return %2, %c0_i32_0 : i32, i32
  }
  func.func @transform_1(%arg0: i32, %arg1: i32) -> (i32, i32) {
    %c1_i32 = arith.constant 1 : i32
    %0 = arith.muli %arg0, %c1_i32 : i32
    %1 = arith.addi %0, %arg1 : i32
    %c0_i32 = arith.constant 0 : i32
    %2 = arith.minsi %1, %c0_i32 : i32
    %c0_i32_0 = arith.constant 0 : i32
    %c0_i32_1 = arith.constant 0 : i32
    return %2, %c0_i32_0 : i32, i32
  }
  func.func @transform_2(%arg0: i32, %arg1: i32) -> (i32, i32, i32) {
    %c0_i32 = arith.constant 0 : i32
    %c0_i32_0 = arith.constant 0 : i32
    %c0_i32_1 = arith.constant 0 : i32
    return %arg0, %c0_i32, %c0_i32_0 : i32, i32, i32
  }
  func.func @transform_3(%arg0: i32, %arg1: i32) -> (i32, i32, i32) {
    %c0_i32 = arith.constant 0 : i32
    %c0_i32_0 = arith.constant 0 : i32
    %c0_i32_1 = arith.constant 0 : i32
    return %arg0, %c0_i32, %c0_i32_0 : i32, i32, i32
  }
  func.func @transform_4(%arg0: i32, %arg1: i32) -> (i32, i32, i32) {
    %c0_i32 = arith.constant 0 : i32
    %c0_i32_0 = arith.constant 0 : i32
    %c0_i32_1 = arith.constant 0 : i32
    return %arg0, %c0_i32, %c0_i32_0 : i32, i32, i32
  }
}

</mosaic_0001>

<llo_original>
// kernel: tpu_custom_call.1
$region0: #{tpu_custom_call.1}
  #allocation0 [shape = 'u32[]', space=smem, size = 0x4, offset = 0x4, fixed_abs, tag = 'smem constant byte address 0x4 - core index']
  #allocation1 [shape = 'u32[72,128]{1,0:T(1,128)}', space=vmem, size = 0x9000, scoped, tag = 'internal scratch']
  %s0 = inlined_call_operand.hbm [shape: f32[16,128], index: 0, kind: input, shape index: {}]
  %s1 = inlined_call_operand.hbm [shape: f32[16,128], index: 1, kind: input, shape index: {}]
  %s2 = inlined_call_operand.hbm [shape: f32[1,8,128], index: 2, kind: output, shape index: {0}]
  %s3 = inlined_call_operand.hbm [shape: f32[1,8,128], index: 3, kind: output, shape index: {1}]
  %s4 = inlined_call_operand.hbm [shape: f32[1,8,128], index: 4, kind: output, shape index: {2}]
  %5 = xla_tuple %s2, %s3, %s4
  %s6 = sld [smem:[#allocation0]]
  $region46: #{tpu_custom_call.1} parent=0
    _
  %s8 = ssub.s32 1, %s6
  %s9 = scalar_select 0, %s8, %s6
  $region1: #{tpu_custom_call.1} parent=0
    #allocation2 [shape = 'u8[8192]{0}', space=vmem, size = 0x2000, scoped, tag = 'input window, operand 0, single buffered']
    #allocation3 [shape = 's32[1]{0}', space=sflag, size = 0x4, scoped, tag = 'scoped memory for tpu_custom_call.1']
    #allocation4 [shape = 's32[1]{0}', space=sflag, size = 0x4, scoped, tag = 'scoped memory for tpu_custom_call.1']
    #allocation5 [shape = 'u8[8192]{0}', space=vmem, size = 0x2000, scoped, tag = 'input window, operand 1, single buffered']
    #allocation6 [shape = 's32[1]{0}', space=sflag, size = 0x4, scoped, tag = 'scoped memory for tpu_custom_call.1']
    #allocation7 [shape = 'u8[4096]{0}', space=vmem, size = 0x1000, scoped, tag = 'output window, operand 0, single buffered']
    #allocation8 [shape = 'u8[4096]{0}', space=vmem, size = 0x1000, scoped, tag = 'output window, operand 1, single buffered']
    #allocation9 [shape = 's32[1]{0}', space=sflag, size = 0x4, scoped, tag = 'scoped memory for tpu_custom_call.1']
    #allocation10 [shape = 'u8[4096]{0}', space=vmem, size = 0x1000, scoped, tag = 'output window, operand 2, single buffered']
    %10 = vsyncpa [#allocation3], 0
    %11 = vsyncpa [#allocation6], 0
    %12 = vsyncpa [#allocation4], 0
    %13 = vsyncpa [#allocation9], 0
    // Predicated region
    $region2: #{tpu_custom_call.1} parent=1 // pred_check
      _
    $region3: #{tpu_custom_call.1} parent=1 // pred_check_branch
      %15 = sbr.rel (0) target = $region5
    $region4: #{tpu_custom_call.1} parent=1 // pred_region
      %s16 = sadd.s32 0, 0
      %p17 = scmp.lt.s32.totalorder %s16, 0
      %s18 = scalar_select %p17, %s16, 0
      %s19 = smul.u32 2, %s18
      %21 = vsyncadd [#allocation3], 0
      %s22 = smul.addr %s19, 8
      %s23 = scalar_lea.hbm %s0, %s22
      %s24 = sshll.u32 %s23, 4
      %s25 = int_to_ptr.hbm [resolvable:$true] %s24
      %s26 = sshll.u32 [#allocation2], 4
      %s27 = int_to_ptr.vmem [resolvable:$true] %s26
      %32 = dma.hbm_to_vmem [thread:$0]  %s25, 256, %s27, [#allocation3], 128, 128, 8
    $region5: #{tpu_custom_call.1} parent=1 // pred_fallthru
      _
    // Predicated region
    $region6: #{tpu_custom_call.1} parent=1 // pred_check
      _
    $region7: #{tpu_custom_call.1} parent=1 // pred_check_branch
      %34 = sbr.rel (0) target = $region9
    $region8: #{tpu_custom_call.1} parent=1 // pred_region
      %s35 = sadd.s32 0, 0
      %p36 = scmp.lt.s32.totalorder %s35, 0
      %s37 = scalar_select %p36, %s35, 0
      %s38 = smul.u32 2, %s37
      %40 = vsyncadd [#allocation6], 0
      %s41 = smul.addr %s38, 8
      %s42 = scalar_lea.hbm %s1, %s41
      %s43 = sshll.u32 %s42, 4
      %s44 = int_to_ptr.hbm [resolvable:$true] %s43
      %s45 = sshll.u32 [#allocation5], 4
      %s46 = int_to_ptr.vmem [resolvable:$true] %s45
      %51 = dma.hbm_to_vmem [thread:$0]  %s44, 256, %s46, [#allocation6], 128, 128, 8
    $region9: #{tpu_custom_call.1} parent=1 // pred_fallthru
      _
    // Predicated region
    $region10: #{tpu_custom_call.1} parent=1 // pred_check
      _
    $region11: #{tpu_custom_call.1} parent=1 // pred_check_branch
      %53 = sbr.rel (0) target = $region13
    $region12: #{tpu_custom_call.1} parent=1 // pred_region
      %55 = dma.done [#allocation3], 256
    $region13: #{tpu_custom_call.1} parent=1 // pred_fallthru
      _
    // Predicated region
    $region14: #{tpu_custom_call.1} parent=1 // pred_check
      _
    $region15: #{tpu_custom_call.1} parent=1 // pred_check_branch
      %57 = sbr.rel (0) target = $region17
    $region16: #{tpu_custom_call.1} parent=1 // pred_region
      %59 = dma.done [#allocation6], 256
    $region17: #{tpu_custom_call.1} parent=1 // pred_fallthru
      _
    %s60 = sadd.s32 0, 0
    %p61 = scmp.lt.s32.totalorder %s60, 0
    %s62 = scalar_select %p61, %s60, 0
    %s63 = smul.u32 2, %s62
    %s64 = sadd.s32 0, 0
    %p65 = scmp.lt.s32.totalorder %s64, 0
    %s66 = scalar_select %p65, %s64, 0
    %s67 = smul.u32 2, %s66
    %p68 = scmp.eq.s32.totalorder 0, 0
    // Predicated region
    $region18: #{tpu_custom_call.1} parent=1 // pred_check
      %p69 = pneg %p68
    $region19: #{tpu_custom_call.1} parent=1 // pred_check_branch
      %71 = sbr.rel (%p69) target = $region21
    $region20: #{tpu_custom_call.1} parent=1 // pred_region
      %72 = vst [vmem:[#allocation7] sm:$0xff] 0.0
      %73 = vst [vmem:[#allocation8] sm:$0xff] 0.0
      %74 = vst [vmem:[#allocation10] sm:$0xff] 0.0
    $region21: #{tpu_custom_call.1} parent=1 // pred_fallthru
      _
    %v75 = vld [vmem:[#allocation2] sm:$0xff]
    %v76 = vld [vmem:[#allocation2 + $0x8] sm:$0xff]
    %v77 = vld [vmem:[#allocation5] sm:$0xff]
    %v78 = vld [vmem:[#allocation5 + $0x8] sm:$0xff]
    %vm79 = vcmp.gt.f32.partialorder %v77, 0.0
    %vm80 = vcmp.gt.f32.partialorder %v78, 0.0
    %vm81 = vcmp.eq.f32.partialorder %v75, 0.0
    %vm82 = vcmp.eq.f32.partialorder %v76, 0.0
    %v83 = vsel %vm81, 1e-24, %v75
    %v84 = vsel %vm82, 1e-24, %v76
    %v85 = vsel %vm79, %v83, 1.0
    %v86 = vsel %vm80, %v84, 1.0
    %v87 = vsel %vm79, %v77, 1.0
    %v88 = vsel %vm80, %v78, 1.0
    %v89 = vlog2.pop %v87
    %v90 = vmul.f32 %v89, 0.6931472
    %v91 = vlog2.pop %v88
    %v92 = vmul.f32 %v91, 0.6931472
    %v93 = vlog2.pop %v85
    %v94 = vmul.f32 %v93, 0.6931472
    %v95 = vlog2.pop %v86
    %v96 = vmul.f32 %v95, 0.6931472
    %v97 = vsub.f32 %v90, %v94
    %v98 = vsub.f32 %v92, %v96
    %v99 = vld [vmem:[#allocation7] sm:$0xff]
    %v100 = vmul.f32 %v97, %v97
    %v101 = vmul.f32 %v98, %v98
    %v102 = vadd.f32 %v100, %v101
    %v103 = vadd.f32 %v99, %v102
    %104 = vst [vmem:[#allocation7] sm:$0xff] %v103
    %v105 = vld [vmem:[#allocation8] sm:$0xff]
    %v106 = vadd.f32 %v97, %v98
    %v107 = vadd.f32 %v105, %v106
    %108 = vst [vmem:[#allocation8] sm:$0xff] %v107
    %v109 = vld [vmem:[#allocation10] sm:$0xff]
    %v110 = vsel %vm79, 1, 0
    %v111 = vsel %vm80, 1, 0
    %v112 = vcvt.s32.f32 %v110
    %v113 = vcvt.s32.f32 %v111
    %v114 = vadd.f32 %v112, %v113
    %v115 = vadd.f32 %v109, %v114
    %116 = vst [vmem:[#allocation10] sm:$0xff] %v115
    // Predicated region
    $region22: #{tpu_custom_call.1} parent=1 // pred_check
      _
    $region23: #{tpu_custom_call.1} parent=1 // pred_check_branch
      %118 = sbr.rel (0) target = $region25
    $region24: #{tpu_custom_call.1} parent=1 // pred_region
      %120 = vsyncadd [#allocation4], 0
      %s122 = sshll.u32 [#allocation7], 4
      %s123 = int_to_ptr.vmem [resolvable:$true] %s122
      %s124 = sshll.u32 %s2, 4
      %s125 = int_to_ptr.hbm [resolvable:$true] %s124
      %127 = dma.vmem_to_hbm [thread:$0]  %s123, 128, %s125, [#allocation4]
    $region25: #{tpu_custom_call.1} parent=1 // pred_fallthru
      _
    // Predicated region
    $region26: #{tpu_custom_call.1} parent=1 // pred_check
      _
    $region27: #{tpu_custom_call.1} parent=1 // pred_check_branch
      %129 = sbr.rel (0) target = $region29
    $region28: #{tpu_custom_call.1} parent=1 // pred_region
      %131 = vsyncadd [#allocation9], 0
      %s133 = sshll.u32 [#allocation8], 4
      %s134 = int_to_ptr.vmem [resolvable:$true] %s133
      %s135 = sshll.u32 %s3, 4
      %s136 = int_to_ptr.hbm [resolvable:$true] %s135
      %138 = dma.vmem_to_hbm [thread:$0]  %s134, 128, %s136, [#allocation9]
    $region29: #{tpu_custom_call.1} parent=1 // pred_fallthru
      _
    // Predicated region
    $region30: #{tpu_custom_call.1} parent=1 // pred_check
      _
    $region31: #{tpu_custom_call.1} parent=1 // pred_check_branch
      %140 = sbr.rel (0) target = $region33
    $region32: #{tpu_custom_call.1} parent=1 // pred_region
      %142 = vsyncadd [#allocation9], 0
      %s144 = sshll.u32 [#allocation10], 4
      %s145 = int_to_ptr.vmem [resolvable:$true] %s144
      %s146 = sshll.u32 %s4, 4
      %s147 = int_to_ptr.hbm [resolvable:$true] %s146
      %149 = dma.vmem_to_hbm [thread:$0]  %s145, 128, %s147, [#allocation9]
    $region33: #{tpu_custom_call.1} parent=1 // pred_fallthru
      _
    // Predicated region
    $region34: #{tpu_custom_call.1} parent=1 // pred_check
      _
    $region35: #{tpu_custom_call.1} parent=1 // pred_check_branch
      %151 = sbr.rel (0) target = $region37
    $region36: #{tpu_custom_call.1} parent=1 // pred_region
      %153 = dma.done [#allocation4], 128
    $region37: #{tpu_custom_call.1} parent=1 // pred_fallthru
      _
    // Predicated region
    $region38: #{tpu_custom_call.1} parent=1 // pred_check
      _
    $region39: #{tpu_custom_call.1} parent=1 // pred_check_branch
      %155 = sbr.rel (0) target = $region41
    $region40: #{tpu_custom_call.1} parent=1 // pred_region
      %157 = dma.done [#allocation9], 128
    $region41: #{tpu_custom_call.1} parent=1 // pred_fallthru
      _
    // Predicated region
    $region42: #{tpu_custom_call.1} parent=1 // pred_check
      _
    $region43: #{tpu_custom_call.1} parent=1 // pred_check_branch
      %159 = sbr.rel (0) target = $region45
    $region44: #{tpu_custom_call.1} parent=1 // pred_region
      %161 = dma.done [#allocation9], 128
    $region45: #{tpu_custom_call.1} parent=1 // pred_fallthru
      _
    %162 = vsyncpa [#allocation3], 1
    %163 = vsyncpa [#allocation6], 1
    %164 = vsyncpa [#allocation4], 1
    %165 = vsyncpa [#allocation9], 1

</llo_original>
